<compile_context>
chip_gen: v6e
topology: v6e:2x2x1
jax: 0.10.0
libtpu: 0.0.40
codegen_flags: <defaults>
</compile_context>

<pallas_src>
import functools

import jax
import jax.numpy as jnp
from jax.experimental import pallas as pl
from jax.experimental.pallas import tpu as pltpu

LANE = 128


def _round_up(a: int, b: int) -> int:
    return (a + b - 1) // b * b


# --------------------------------------------------------------------------- #
# Kernel 1: 4-layer MLP -> lane-dense logits tile  +  fused softmax(dim=0) stats
# --------------------------------------------------------------------------- #
def _mlp_stats_kernel(x_ref, w1_ref, w234_ref, b_ref, logits_ref, stats_ref,
                      *, h, b_real, tb):
    i = pl.program_id(0)

    def layer(a, w, b, relu):
        y = jnp.dot(a.astype(jnp.bfloat16), w,        # bf16 x bf16 -> f32 acc (MXU)
                    preferred_element_type=jnp.float32) + b
        return jnp.maximum(y, 0.0) if relu else y

    # fc1..fc3 (Dropout is identity in eval mode) + output Linear.
    h1 = layer(x_ref[...],  w1_ref[...],            b_ref[0:1, :], True)
    h2 = layer(h1,          w234_ref[0:h, :],       b_ref[1:2, :], True)
    h3 = layer(h2,          w234_ref[h:2 * h, :],   b_ref[2:3, :], True)
    logits = layer(h3,      w234_ref[2 * h:3 * h, :], b_ref[3:4, :], False)
    logits_ref[...] = logits                          # full-width, unmasked store

    # ---- fused softmax(dim=0) pass 1: online per-column max / sum-exp ---------- #
    @pl.when(i == 0)
    def _():
        row = jax.lax.broadcasted_iota(jnp.int32, (8, h), 0)
        stats_ref[...] = jnp.where(row == 0,
                                   jnp.float32(-jnp.inf), jnp.float32(0.0))

    # Mask zero-padded batch rows so they don't enter the softmax denominator.
    rows = jax.lax.broadcasted_iota(jnp.int32, logits.shape, 0) + i * tb
    lm = jnp.where(rows < b_real, logits, -jnp.inf)

    m_old = stats_ref[0:1, :]
    s_old = stats_ref[1:2, :]
    m_new = jnp.maximum(m_old, jnp.max(lm, axis=0, keepdims=True))
    s_new = s_old * jnp.exp(m_old - m_new) + \
        jnp.sum(jnp.exp(lm - m_new), axis=0, keepdims=True)
    stats_ref[0:1, :] = m_new
    stats_ref[1:2, :] = s_new


# --------------------------------------------------------------------------- #
# Kernel 2: normalize each batch tile with the global per-column max / sum
# --------------------------------------------------------------------------- #
def _softmax_norm_kernel(logits_ref, stats_ref, o_ref):
    m = stats_ref[0:1, :]
    inv = pl.reciprocal(stats_ref[1:2, :], approx=True)   # EUP slot, ~free
    o_ref[...] = (jnp.exp(logits_ref[...] - m) * inv).astype(o_ref.dtype)


# --------------------------------------------------------------------------- #
# Packing + forward wrapper
# --------------------------------------------------------------------------- #
def _pack_params(params, input_dim, output_dim):
    dim1 = params["w1"].shape[1]
    h = _round_up(max(dim1, output_dim), LANE)

    def pad_w(w, rows, cols):
        return jnp.zeros((rows, cols), jnp.float32).at[:w.shape[0], :w.shape[1]].set(w)

    w1 = pad_w(params["w1"], input_dim, h).astype(jnp.bfloat16)   # rows stay = input_dim
    w234 = jnp.concatenate(
        [pad_w(params["w2"], h, h),
         pad_w(params["w3"], h, h),
         pad_w(params["w4"], h, h)], axis=0).astype(jnp.bfloat16)

    b_slab = jnp.zeros((8, h), jnp.float32)
    for i in range(4):
        b = params[f"b{i + 1}"].reshape(-1)
        b_slab = b_slab.at[i, :b.shape[0]].set(b)
    return w1, w234, b_slab, h


def full_connected_forward(x, params, *, tb=256):
    """x: [B, input_dim] f32; params: dict of (w [in,out], b [1,out]) f32."""
    B, input_dim = x.shape
    output_dim = params["w4"].shape[1]
    w1, w234, b_slab, h = _pack_params(params, input_dim, output_dim)

    tb = max(8, (min(tb, _round_up(B, 8)) // 8) * 8)   # multiple of 8, <= padded batch
    b_pad = _round_up(B, tb)
    nb = b_pad // tb
    # Only pad (and copy) the batch axis when needed; feature axis stays unpadded.
    x_in = x if b_pad == B else jnp.zeros((b_pad, input_dim), x.dtype).at[:B].set(x)

    # ---- kernel 1: pipelined MLP -> logits slab + fused softmax stats ------------ #
    logits, stats = pl.pallas_call(
        functools.partial(_mlp_stats_kernel, h=h, b_real=B, tb=tb),
        out_shape=(jax.ShapeDtypeStruct((b_pad, h), jnp.float32),
                   jax.ShapeDtypeStruct((8, h), jnp.float32)),
        grid=(nb,),
        in_specs=[
            pl.BlockSpec((tb, input_dim), lambda i: (i, 0)),   # x tile (pipelined)
            pl.BlockSpec((input_dim, h), lambda i: (0, 0)),    # w1 resident
            pl.BlockSpec((3 * h, h), lambda i: (0, 0)),        # w2/w3/w4 slab resident
            pl.BlockSpec((8, h), lambda i: (0, 0)),            # biases resident
        ],
        out_specs=(pl.BlockSpec((tb, h), lambda i: (i, 0)),    # logits tile
                   pl.BlockSpec((8, h), lambda i: (0, 0))),    # stats accumulator
        compiler_params=pltpu.CompilerParams(dimension_semantics=("arbitrary",)),
    )(x_in, w1, w234, b_slab)

    # ---- kernel 2: normalize (batch-parallel) ------------------------------------ #
    probs = pl.pallas_call(
        _softmax_norm_kernel,
        out_shape=jax.ShapeDtypeStruct((b_pad, h), jnp.float32),
        grid=(nb,),
        in_specs=[
            pl.BlockSpec((tb, h), lambda i: (i, 0)),
            pl.BlockSpec((8, h), lambda i: (0, 0)),
        ],
        out_specs=pl.BlockSpec((tb, h), lambda i: (i, 0)),
        compiler_params=pltpu.CompilerParams(dimension_semantics=("parallel",)),
    )(logits, stats)

    return probs[:B, :output_dim]


# --------------------------------------------------------------------------- #
# Parameters + pure-JAX reference
# --------------------------------------------------------------------------- #
def init_params(key, input_dim, output_dim):
    assert input_dim >= 8, "input_dim//2//2//2 must stay positive"
    dim1, dim2, dim3 = input_dim // 2, input_dim // 4, input_dim // 8
    dims = [(input_dim, dim1), (dim1, dim2), (dim2, dim3), (dim3, output_dim)]
    params = {}
    for i, (din, dout) in enumerate(dims, start=1):
        key, kw, kb = jax.random.split(key, 3)
        bound = 1.0 / jnp.sqrt(din)                     # nn.Linear default uniform bound
        params[f"w{i}"] = jax.random.uniform(kw, (din, dout), jnp.float32, -bound, bound)
        params[f"b{i}"] = jax.random.uniform(kb, (1, dout), jnp.float32, -bound, bound)
    return params


def reference_forward(x, params):
    h = x
    for i in range(1, 4):
        h = jnp.maximum(h @ params[f"w{i}"] + params[f"b{i}"], 0.0)
    logits = h @ params["w4"] + params["b4"]
    return jax.nn.softmax(logits, axis=0)               # softmax over the batch axis


# --------------------------------------------------------------------------- #
if __name__ == "__main__":
    input_dim, output_dim, batch = 64, 4, 80            # batch not a tile multiple on purpose

    key = jax.random.PRNGKey(0)
    kx, kp = jax.random.split(key)
    x = jax.random.normal(kx, (batch, input_dim), jnp.float32)
    params = init_params(kp, input_dim, output_dim)

    out = full_connected_forward(x, params, tb=32)      # 3 grid steps + padded-row masking
    out = jax.block_until_ready(out)
    assert out.shape == (batch, output_dim)

    # Softmax over dim=0 => every column must sum to 1 over the real batch rows.
    assert jnp.allclose(out.sum(axis=0), 1.0, atol=5e-3), "softmax columns do not sum to 1"

    # Structural check vs f32 reference (tolerance covers bf16 matmul operands).
    ref = reference_forward(x, params)
    assert jnp.allclose(out, ref, atol=5e-3, rtol=5e-2), "mismatch vs JAX reference"

    print("KERNEL_OK")
</pallas_src>

<mosaic_0001>
module attributes {stable_mosaic.version = 11 : i64} {
  func.func @_mlp_stats_kernel(%arg0: i32, %arg1: memref<32x64xf32, #tpu.memory_space<vmem>>, %arg2: memref<64x128xbf16, #tpu.memory_space<vmem>>, %arg3: memref<384x128xbf16, #tpu.memory_space<vmem>>, %arg4: memref<8x128xf32, #tpu.memory_space<vmem>>, %arg5: memref<32x128xf32, #tpu.memory_space<vmem>>, %arg6: memref<8x128xf32, #tpu.memory_space<vmem>>) attributes {dimension_semantics = [#tpu.dimension_semantics<arbitrary>], iteration_bounds = array<i64: 3>, scalar_prefetch = 0 : i64, scratch_operands = 0 : i64, tpu.core_type = #tpu.core_type<tc>, window_params = [{transform_indices = @transform_0, window_bounds = array<i64: 32, 64>}, {pipeline_mode = #tpu.pipeline_mode<synchronous>, transform_indices = @transform_1, window_bounds = array<i64: 64, 128>}, {pipeline_mode = #tpu.pipeline_mode<synchronous>, transform_indices = @transform_2, window_bounds = array<i64: 384, 128>}, {pipeline_mode = #tpu.pipeline_mode<synchronous>, transform_indices = @transform_3, window_bounds = array<i64: 8, 128>}, {transform_indices = @transform_4, window_bounds = array<i64: 32, 128>}, {pipeline_mode = #tpu.pipeline_mode<synchronous>, transform_indices = @transform_5, window_bounds = array<i64: 8, 128>}]} {
    %c0 = arith.constant 0 : index
    %c0_0 = arith.constant 0 : index
    %0 = vector.load %arg1[%c0, %c0_0] : memref<32x64xf32, #tpu.memory_space<vmem>>, vector<32x64xf32>
    %c0_1 = arith.constant 0 : index
    %c0_2 = arith.constant 0 : index
    %1 = vector.load %arg2[%c0_1, %c0_2] : memref<64x128xbf16, #tpu.memory_space<vmem>>, vector<64x128xbf16>
    %c0_3 = arith.constant 0 : index
    %c0_4 = arith.constant 0 : index
    %2 = vector.load %arg4[%c0_3, %c0_4] : memref<8x128xf32, #tpu.memory_space<vmem>>, vector<1x128xf32>
    %3 = arith.truncf %0 : vector<32x64xf32> to vector<32x64xbf16>
    %cst = arith.constant dense<0.000000e+00> : vector<32x128xf32>
    %4 = tpu.matmul %3, %1, %cst {dimension_numbers = #tpu.dot_dimension_numbers<[1], [0], [0], [1], [0, 0, 1, 1], [], []>} : vector<32x64xbf16>, vector<64x128xbf16>, vector<32x128xf32> -> vector<32x128xf32>
    %5 = vector.broadcast %2 : vector<1x128xf32> to vector<32x128xf32>
    %6 = arith.addf %4, %5 : vector<32x128xf32>
    %cst_5 = arith.constant 0.000000e+00 : f32
    %7 = vector.broadcast %cst_5 : f32 to vector<32x128xf32>
    %8 = arith.maximumf %6, %7 : vector<32x128xf32>
    %c0_6 = arith.constant 0 : index
    %c0_7 = arith.constant 0 : index
    %9 = vector.load %arg3[%c0_6, %c0_7] : memref<384x128xbf16, #tpu.memory_space<vmem>>, vector<128x128xbf16>
    %c1 = arith.constant 1 : index
    %c0_8 = arith.constant 0 : index
    %10 = vector.load %arg4[%c1, %c0_8] : memref<8x128xf32, #tpu.memory_space<vmem>>, vector<1x128xf32>
    %11 = arith.truncf %8 : vector<32x128xf32> to vector<32x128xbf16>
    %cst_9 = arith.constant dense<0.000000e+00> : vector<32x128xf32>
    %12 = tpu.matmul %11, %9, %cst_9 {dimension_numbers = #tpu.dot_dimension_numbers<[1], [0], [0], [1], [0, 0, 1, 1], [], []>} : vector<32x128xbf16>, vector<128x128xbf16>, vector<32x128xf32> -> vector<32x128xf32>
    %13 = vector.broadcast %10 : vector<1x128xf32> to vector<32x128xf32>
    %14 = arith.addf %12, %13 : vector<32x128xf32>
    %cst_10 = arith.constant 0.000000e+00 : f32
    %15 = vector.broadcast %cst_10 : f32 to vector<32x128xf32>
    %16 = arith.maximumf %14, %15 : vector<32x128xf32>
    %c128 = arith.constant 128 : index
    %c0_11 = arith.constant 0 : index
    %17 = vector.load %arg3[%c128, %c0_11] : memref<384x128xbf16, #tpu.memory_space<vmem>>, vector<128x128xbf16>
    %c2 = arith.constant 2 : index
    %c0_12 = arith.constant 0 : index
    %18 = vector.load %arg4[%c2, %c0_12] : memref<8x128xf32, #tpu.memory_space<vmem>>, vector<1x128xf32>
    %19 = arith.truncf %16 : vector<32x128xf32> to vector<32x128xbf16>
    %cst_13 = arith.constant dense<0.000000e+00> : vector<32x128xf32>
    %20 = tpu.matmul %19, %17, %cst_13 {dimension_numbers = #tpu.dot_dimension_numbers<[1], [0], [0], [1], [0, 0, 1, 1], [], []>} : vector<32x128xbf16>, vector<128x128xbf16>, vector<32x128xf32> -> vector<32x128xf32>
    %21 = vector.broadcast %18 : vector<1x128xf32> to vector<32x128xf32>
    %22 = arith.addf %20, %21 : vector<32x128xf32>
    %cst_14 = arith.constant 0.000000e+00 : f32
    %23 = vector.broadcast %cst_14 : f32 to vector<32x128xf32>
    %24 = arith.maximumf %22, %23 : vector<32x128xf32>
    %c256 = arith.constant 256 : index
    %c0_15 = arith.constant 0 : index
    %25 = vector.load %arg3[%c256, %c0_15] : memref<384x128xbf16, #tpu.memory_space<vmem>>, vector<128x128xbf16>
    %c3 = arith.constant 3 : index
    %c0_16 = arith.constant 0 : index
    %26 = vector.load %arg4[%c3, %c0_16] : memref<8x128xf32, #tpu.memory_space<vmem>>, vector<1x128xf32>
    %27 = arith.truncf %24 : vector<32x128xf32> to vector<32x128xbf16>
    %cst_17 = arith.constant dense<0.000000e+00> : vector<32x128xf32>
    %28 = tpu.matmul %27, %25, %cst_17 {dimension_numbers = #tpu.dot_dimension_numbers<[1], [0], [0], [1], [0, 0, 1, 1], [], []>} : vector<32x128xbf16>, vector<128x128xbf16>, vector<32x128xf32> -> vector<32x128xf32>
    %29 = vector.broadcast %26 : vector<1x128xf32> to vector<32x128xf32>
    %30 = arith.addf %28, %29 : vector<32x128xf32>
    %c0_18 = arith.constant 0 : index
    %c0_19 = arith.constant 0 : index
    %31 = vector.load %arg5[%c0_18, %c0_19] : memref<32x128xf32, #tpu.memory_space<vmem>>, vector<32x128xf32>
    tpu.vector_store %arg5[%c0_18, %c0_19], %30 {strides = array<i32>} : memref<32x128xf32, #tpu.memory_space<vmem>>, vector<32x128xf32>,
    %c0_i32 = arith.constant 0 : i32
    %32 = arith.cmpi eq, %arg0, %c0_i32 : i32
    %33 = arith.extui %32 : i1 to i32
    %c0_i32_20 = arith.constant 0 : i32
    %34 = arith.cmpi ne, %33, %c0_i32_20 : i32
    scf.if %34 {
      %59 = tpu.iota {dimensions = array<i32: 0>} : vector<8x128xi32>
      %c0_i32_32 = arith.constant 0 : i32
      %60 = vector.broadcast %c0_i32_32 : i32 to vector<8x128xi32>
      %61 = arith.cmpi eq, %59, %60 : vector<8x128xi32>
      %cst_33 = arith.constant 0xFF800000 : f32
      %cst_34 = arith.constant 0.000000e+00 : f32
      %62 = vector.broadcast %cst_33 : f32 to vector<8x128xf32>
      %63 = vector.broadcast %cst_34 : f32 to vector<8x128xf32>
      %64 = arith.select %61, %62, %63 : vector<8x128xi1>, vector<8x128xf32>
      %c0_35 = arith.constant 0 : index
      %c0_36 = arith.constant 0 : index
      %65 = vector.load %arg6[%c0_35, %c0_36] : memref<8x128xf32, #tpu.memory_space<vmem>>, vector<8x128xf32>
      tpu.vector_store %arg6[%c0_35, %c0_36], %64 {strides = array<i32>} : memref<8x128xf32, #tpu.memory_space<vmem>>, vector<8x128xf32>,
    } else {
    }
    %35 = tpu.iota {dimensions = array<i32: 0>} : vector<32x128xi32>
    %c32_i32 = arith.constant 32 : i32
    %36 = arith.muli %arg0, %c32_i32 : i32
    %37 = vector.broadcast %36 : i32 to vector<32x128xi32>
    %38 = arith.addi %35, %37 : vector<32x128xi32>
    %c80_i32 = arith.constant 80 : i32
    %39 = vector.broadcast %c80_i32 : i32 to vector<32x128xi32>
    %40 = arith.cmpi slt, %38, %39 : vector<32x128xi32>
    %cst_21 = arith.constant 0xFF800000 : f32
    %41 = vector.broadcast %cst_21 : f32 to vector<32x128xf32>
    %42 = arith.select %40, %30, %41 : vector<32x128xi1>, vector<32x128xf32>
    %c0_22 = arith.constant 0 : index
    %c0_23 = arith.constant 0 : index
    %43 = vector.load %arg6[%c0_22, %c0_23] : memref<8x128xf32, #tpu.memory_space<vmem>>, vector<1x128xf32>
    %c1_24 = arith.constant 1 : index
    %c0_25 = arith.constant 0 : index
    %44 = vector.load %arg6[%c1_24, %c0_25] : memref<8x128xf32, #tpu.memory_space<vmem>>, vector<1x128xf32>
    %cst_26 = arith.constant dense<0xFF800000> : vector<128xf32>
    %45 = vector.multi_reduction <maximumf>, %42, %cst_26 [0] : vector<32x128xf32> to vector<128xf32>
    %46 = vector.shape_cast %45 : vector<128xf32> to vector<1x128xf32>
    %47 = arith.maximumf %43, %46 : vector<1x128xf32>
    %48 = arith.subf %43, %47 : vector<1x128xf32>
    %49 = math.exp %48 : vector<1x128xf32>
    %50 = arith.mulf %44, %49 : vector<1x128xf32>
    %51 = vector.broadcast %47 : vector<1x128xf32> to vector<32x128xf32>
    %52 = arith.subf %42, %51 : vector<32x128xf32>
    %53 = math.exp %52 : vector<32x128xf32>
    %cst_27 = arith.constant dense<0.000000e+00> : vector<128xf32>
    %54 = vector.multi_reduction <add>, %53, %cst_27 [0] : vector<32x128xf32> to vector<128xf32>
    %55 = vector.shape_cast %54 : vector<128xf32> to vector<1x128xf32>
    %56 = arith.addf %50, %55 : vector<1x128xf32>
    %c0_28 = arith.constant 0 : index
    %c0_29 = arith.constant 0 : index
    %57 = vector.load %arg6[%c0_28, %c0_29] : memref<8x128xf32, #tpu.memory_space<vmem>>, vector<1x128xf32>
    tpu.vector_store %arg6[%c0_28, %c0_29], %47 {strides = array<i32>} : memref<8x128xf32, #tpu.memory_space<vmem>>, vector<1x128xf32>,
    %c1_30 = arith.constant 1 : index
    %c0_31 = arith.constant 0 : index
    %58 = vector.load %arg6[%c1_30, %c0_31] : memref<8x128xf32, #tpu.memory_space<vmem>>, vector<1x128xf32>
    tpu.vector_store %arg6[%c1_30, %c0_31], %56 {strides = array<i32>} : memref<8x128xf32, #tpu.memory_space<vmem>>, vector<1x128xf32>,
    return
  }
  func.func @transform_0(%arg0: i32) -> (i32, i32) {
    %c0_i32 = arith.constant 0 : i32
    %c0_i32_0 = arith.constant 0 : i32
    return %arg0, %c0_i32 : i32, i32
  }
  func.func @transform_1(%arg0: i32) -> (i32, i32) {
    %c0_i32 = arith.constant 0 : i32
    %c0_i32_0 = arith.constant 0 : i32
    %c0_i32_1 = arith.constant 0 : i32
    return %c0_i32, %c0_i32_0 : i32, i32
  }
  func.func @transform_2(%arg0: i32) -> (i32, i32) {
    %c0_i32 = arith.constant 0 : i32
    %c0_i32_0 = arith.constant 0 : i32
    %c0_i32_1 = arith.constant 0 : i32
    return %c0_i32, %c0_i32_0 : i32, i32
  }
  func.func @transform_3(%arg0: i32) -> (i32, i32) {
    %c0_i32 = arith.constant 0 : i32
    %c0_i32_0 = arith.constant 0 : i32
    %c0_i32_1 = arith.constant 0 : i32
    return %c0_i32, %c0_i32_0 : i32, i32
  }
  func.func @transform_4(%arg0: i32) -> (i32, i32) {
    %c0_i32 = arith.constant 0 : i32
    %c0_i32_0 = arith.constant 0 : i32
    return %arg0, %c0_i32 : i32, i32
  }
  func.func @transform_5(%arg0: i32) -> (i32, i32) {
    %c0_i32 = arith.constant 0 : i32
    %c0_i32_0 = arith.constant 0 : i32
    %c0_i32_1 = arith.constant 0 : i32
    return %c0_i32, %c0_i32_0 : i32, i32
  }
}

</mosaic_0001>

<llo_original>
// kernel: tpu_custom_call.1
$region0: #{tpu_custom_call.1}
  #allocation0 [shape = 'u32[]', space=smem, size = 0x4, offset = 0x4, fixed_abs, tag = 'smem constant byte address 0x4 - core index']
  #allocation1 [shape = 'u32[144,128]{1,0:T(1,128)}', space=vmem, size = 0x12000, scoped, tag = 'internal scratch']
  %s0 = inlined_call_operand.vmem [shape: f32[96,64], index: 0, kind: input, shape index: {}]
  %s1 = inlined_call_operand.vmem [shape: bf16[64,128], index: 1, kind: input, shape index: {}]
  %s2 = inlined_call_operand.hbm [shape: bf16[384,128], index: 2, kind: input, shape index: {}]
  %s3 = inlined_call_operand.vmem [shape: f32[8,128], index: 3, kind: input, shape index: {}]
  %s4 = inlined_call_operand.hbm [shape: f32[96,128], index: 4, kind: output, shape index: {0}]
  %s5 = inlined_call_operand.hbm [shape: f32[8,128], index: 5, kind: output, shape index: {1}]
  %6 = xla_tuple %s4, %s5
  %s7 = sld [smem:[#allocation0]]
  $region65: #{tpu_custom_call.1} parent=0
    _
  %s9 = ssub.s32 1, %s7
  %s10 = scalar_select 0, %s9, %s7
  $region1: #{tpu_custom_call.1} parent=0
    #allocation2 [shape = 'u8[98304]{0}', space=vmem, size = 0x18000, scoped, tag = 'input window, operand 2, single buffered']
    #allocation3 [shape = 's32[2]{0}', space=sflag, size = 0x8, scoped, tag = 'scoped memory for tpu_custom_call.1']
    #allocation4 [shape = 's32[2]{0}', space=sflag, size = 0x8, scoped, tag = 'scoped memory for tpu_custom_call.1']
    #allocation5 [shape = 'u8[32768]{0}', space=vmem, size = 0x8000, scoped, tag = 'output window, operand 0']
    #allocation6 [shape = 'u8[4096]{0}', space=vmem, size = 0x1000, scoped, tag = 'output window, operand 1, single buffered']
    #allocation7 [shape = 's32[1]{0}', space=sflag, size = 0x4, scoped, tag = 'scoped memory for tpu_custom_call.1']
    %11 = vsyncpa [#allocation3], 0
    %12 = vsyncpa [#allocation4], 0
    %s13 = scalar_lea.sflag [#allocation4], 1
    %14 = vsyncpa %s13, 0
    %15 = vsyncpa [#allocation7], 0
    loop: start=0, step=1, limit=5
    $region2: #{tpu_custom_call.1} parent=1 // loop_pre_header
      _
    $region3: #{tpu_custom_call.1} parent=1 // loop_header
      %s17 = sphi 0, %s21
      %p18 = scmp.ge.s32.totalorder %s17, 5
      %s27 = sphi 0, %s29
      %s30 = sphi 0, %s27
      %s31 = sphi 0, %s30
      %s47 = sphi 0, %s31
      %s51 = sphi 0, %s51
      %s53 = sphi 0, %s51
      %s54 = sphi 0, %s53
      %s68 = sphi 0, %s54
      %s72 = sphi 0, %s72
      %s74 = sphi 0, %s72
      %s75 = sphi 0, %s74
      %s89 = sphi 0, %s75
      %s93 = sphi 0, %s93
      %s95 = sphi 0, %s93
      %s96 = sphi 0, %s95
      %s110 = sphi 0, %s96
      %s116 = sphi 0, %s118
      %s119 = sphi 0, %s116
      %s120 = sphi 0, %s119
      %s136 = sphi 0, %s120
      %s140 = sphi 0, %s140
      %s142 = sphi 0, %s140
      %s143 = sphi 0, %s142
      %s157 = sphi 0, %s143
    $region4: #{tpu_custom_call.1} parent=1 // loop_header_branch
      %20 = sbr.rel (%p18) target = $region8
    $region5: #{tpu_custom_call.1} parent=1 // loop_body
      %s22 = ssub.s32 %s17, 1
      %s23 = ssub.s32 %s17, 2
      %s24 = sadd.s32 %s17, 1
      %s25 = ssub.s32 %s17, %s24
      %p26 = scmp.eq.s32.totalorder %s25, 0
      %s28 = sadd.s32 %s27, 1
      %s29 = scalar_select %p26, %s27, %s28
      %p32 = pneg %p26
      %p33 = scmp.eq.s32.totalorder %s17, 2
      %p34 = por %p32, %p33
      %p35 = scmp.ne.s32.totalorder %s27, %s30
      %p36 = scmp.eq.s32.totalorder %s17, 0
      %p37 = por %p35, %p36
      %p38 = scmp.ne.s32.totalorder %s27, %s30
      %p39 = scmp.eq.s32.totalorder %s22, 2
      %p40 = por %p38, %p39
      %p41 = scmp.ne.s32.totalorder %s30, %s31
      %p42 = scmp.eq.s32.totalorder %s22, 0
      %p43 = por %p41, %p42
      %p44 = scmp.ne.s32.totalorder %s30, %s31
      %p45 = scmp.eq.s32.totalorder %s23, 2
      %p46 = por %p44, %p45
      %p48 = scmp.ne.s32.totalorder %s31, %s47
      %p49 = scmp.eq.s32.totalorder %s23, 0
      %p50 = por %p48, %p49
      %s52 = sadd.s32 %s51, 1
      %p55 = scmp.eq.s32.totalorder %s17, 2
      %p56 = scmp.ne.s32.totalorder %s51, %s53
      %p57 = scmp.eq.s32.totalorder %s17, 0
      %p58 = por %p56, %p57
      %p59 = scmp.ne.s32.totalorder %s51, %s53
      %p60 = scmp.eq.s32.totalorder %s22, 2
      %p61 = por %p59, %p60
      %p62 = scmp.ne.s32.totalorder %s53, %s54
      %p63 = scmp.eq.s32.totalorder %s22, 0
      %p64 = por %p62, %p63
      %p65 = scmp.ne.s32.totalorder %s53, %s54
      %p66 = scmp.eq.s32.totalorder %s23, 2
      %p67 = por %p65, %p66
      %p69 = scmp.ne.s32.totalorder %s54, %s68
      %p70 = scmp.eq.s32.totalorder %s23, 0
      %p71 = por %p69, %p70
      %s73 = sadd.s32 %s72, 1
      %p76 = scmp.eq.s32.totalorder %s17, 2
      %p77 = scmp.ne.s32.totalorder %s72, %s74
      %p78 = scmp.eq.s32.totalorder %s17, 0
      %p79 = por %p77, %p78
      %p80 = scmp.ne.s32.totalorder %s72, %s74
      %p81 = scmp.eq.s32.totalorder %s22, 2
      %p82 = por %p80, %p81
      %p83 = scmp.ne.s32.totalorder %s74, %s75
      %p84 = scmp.eq.s32.totalorder %s22, 0
      %p85 = por %p83, %p84
      %p86 = scmp.ne.s32.totalorder %s74, %s75
      %p87 = scmp.eq.s32.totalorder %s23, 2
      %p88 = por %p86, %p87
      %p90 = scmp.ne.s32.totalorder %s75, %s89
      %p91 = scmp.eq.s32.totalorder %s23, 0
      %p92 = por %p90, %p91
      %s94 = sadd.s32 %s93, 1
      %p97 = scmp.eq.s32.totalorder %s17, 2
      %p98 = scmp.ne.s32.totalorder %s93, %s95
      %p99 = scmp.eq.s32.totalorder %s17, 0
      %p100 = por %p98, %p99
      %p101 = scmp.ne.s32.totalorder %s93, %s95
      %p102 = scmp.eq.s32.totalorder %s22, 2
      %p103 = por %p101, %p102
      %p104 = scmp.ne.s32.totalorder %s95, %s96
      %p105 = scmp.eq.s32.totalorder %s22, 0
      %p106 = por %p104, %p105
      %p107 = scmp.ne.s32.totalorder %s95, %s96
      %p108 = scmp.eq.s32.totalorder %s23, 2
      %p109 = por %p107, %p108
      %p111 = scmp.ne.s32.totalorder %s96, %s110
      %p112 = scmp.eq.s32.totalorder %s23, 0
      %p113 = por %p111, %p112
      %s114 = ssub.s32 %s17, %s24
      %p115 = scmp.eq.s32.totalorder %s114, 0
      %s117 = sadd.s32 %s116, 1
      %s118 = scalar_select %p115, %s116, %s117
      %p121 = pneg %p115
      %p122 = scmp.eq.s32.totalorder %s17, 2
      %p123 = por %p121, %p122
      %p124 = scmp.ne.s32.totalorder %s116, %s119
      %p125 = scmp.eq.s32.totalorder %s17, 0
      %p126 = por %p124, %p125
      %p127 = scmp.ne.s32.totalorder %s116, %s119
      %p128 = scmp.eq.s32.totalorder %s22, 2
      %p129 = por %p127, %p128
      %p130 = scmp.ne.s32.totalorder %s119, %s120
      %p131 = scmp.eq.s32.totalorder %s22, 0
      %p132 = por %p130, %p131
      %p133 = scmp.ne.s32.totalorder %s119, %s120
      %p134 = scmp.eq.s32.totalorder %s23, 2
      %p135 = por %p133, %p134
      %p137 = scmp.ne.s32.totalorder %s120, %s136
      %p138 = scmp.eq.s32.totalorder %s23, 0
      %p139 = por %p137, %p138
      %s141 = sadd.s32 %s140, 1
      %p144 = scmp.eq.s32.totalorder %s17, 2
      %p145 = scmp.ne.s32.totalorder %s140, %s142
      %p146 = scmp.eq.s32.totalorder %s17, 0
      %p147 = por %p145, %p146
      %p148 = scmp.ne.s32.totalorder %s140, %s142
      %p149 = scmp.eq.s32.totalorder %s22, 2
      %p150 = por %p148, %p149
      %p151 = scmp.ne.s32.totalorder %s142, %s143
      %p152 = scmp.eq.s32.totalorder %s22, 0
      %p153 = por %p151, %p152
      %p154 = scmp.ne.s32.totalorder %s142, %s143
      %p155 = scmp.eq.s32.totalorder %s23, 2
      %p156 = por %p154, %p155
      %p158 = scmp.ne.s32.totalorder %s143, %s157
      %p159 = scmp.eq.s32.totalorder %s23, 0
      %p160 = por %p158, %p159
      %p161 = scmp.le.s32.totalorder 1, %s17
      %p162 = scmp.lt.s32.totalorder %s17, 4
      %p163 = pnand %p161, %p162
      %p164 = pneg %p163
      // Predicated region
      $region9: #{tpu_custom_call.1} parent=5 // pred_check
        _
      $region10: #{tpu_custom_call.1} parent=5 // pred_check_branch
        %166 = sbr.rel (%p163) target = $region12
      $region11: #{tpu_custom_call.1} parent=5 // pred_region
        %s167 = ssub.s32 %s17, 1
        // Predicated region
        $region13: #{tpu_custom_call.1} parent=11 // pred_check
          %p168 = pneg %p64
        $region14: #{tpu_custom_call.1} parent=11 // pred_check_branch
          %170 = sbr.rel (%p168) target = $region16
        $region15: #{tpu_custom_call.1} parent=11 // pred_region
          _
        $region16: #{tpu_custom_call.1} parent=11 // pred_fallthru
          _
        // Predicated region
        $region17: #{tpu_custom_call.1} parent=11 // pred_check
          %p171 = pneg %p85
        $region18: #{tpu_custom_call.1} parent=11 // pred_check_branch
          %173 = sbr.rel (%p171) target = $region20
        $region19: #{tpu_custom_call.1} parent=11 // pred_region
          %s175 = ssub.s32 3072, 3072
          %176 = vsyncadd [#allocation3], %s175
          %s177 = sshll.u32 [#allocation2], 4
          %s178 = int_to_ptr.vmem [resolvable:$true] %s177
          %183 = dma.hbm_to_vmem [thread:$0]  %s2, 3072, %s178, [#allocation3], 64, 64, 4
        $region20: #{tpu_custom_call.1} parent=11 // pred_fallthru
          _
        // Predicated region
        $region21: #{tpu_custom_call.1} parent=11 // pred_check
          %p184 = pneg %p106
        $region22: #{tpu_custom_call.1} parent=11 // pred_check_branch
          %186 = sbr.rel (%p184) target = $region24
        $region23: #{tpu_custom_call.1} parent=11 // pred_region
          _
        $region24: #{tpu_custom_call.1} parent=11 // pred_fallthru
          _
      $region12: #{tpu_custom_call.1} parent=5 // pred_fallthru
        _
      %p187 = scmp.lt.s32.totalorder %s17, 3
      // Predicated region
      $region25: #{tpu_custom_call.1} parent=5 // pred_check
        %p188 = pneg %p187
      $region26: #{tpu_custom_call.1} parent=5 // pred_check_branch
        %190 = sbr.rel (%p188) target = $region28
      $region27: #{tpu_custom_call.1} parent=5 // pred_region
        // Predicated region
        $region29: #{tpu_custom_call.1} parent=27 // pred_check
          %p191 = pneg %p37
        $region30: #{tpu_custom_call.1} parent=27 // pred_check_branch
          %193 = sbr.rel (%p191) target = $region32
        $region31: #{tpu_custom_call.1} parent=27 // pred_region
          %s194 = smul.u32 4, %s17
          %p195 = scmp.lt.s32.totalorder %s194, 11
          %s196 = scalar_select %p195, %s194, 11
          %s197 = smul.addr %s196, 8
          %s198 = scalar_lea.vmem %s0, %s197
          %s199 = smul.u32 4, %s17
        $region32: #{tpu_custom_call.1} parent=27 // pred_fallthru
          _
      $region28: #{tpu_custom_call.1} parent=5 // pred_fallthru
        _
      %p200 = scmp.le.s32.totalorder 1, %s17
      %p201 = scmp.lt.s32.totalorder %s17, 4
      %p202 = pnand %p200, %p201
      %p203 = pneg %p202
      // Predicated region
      $region33: #{tpu_custom_call.1} parent=5 // pred_check
        _
      $region34: #{tpu_custom_call.1} parent=5 // pred_check_branch
        %205 = sbr.rel (%p202) target = $region36
      $region35: #{tpu_custom_call.1} parent=5 // pred_region
        %s206 = ssub.s32 %s17, 1
        // Predicated region
        $region37: #{tpu_custom_call.1} parent=35 // pred_check
          %p207 = pneg %p85
        $region38: #{tpu_custom_call.1} parent=35 // pred_check_branch
          %209 = sbr.rel (%p207) target = $region40
        $region39: #{tpu_custom_call.1} parent=35 // pred_region
          %210 = dma.done [#allocation3], 3072
        $region40: #{tpu_custom_call.1} parent=35 // pred_fallthru
          _
        %s211 = smul.u32 4, %s22
        %p212 = scmp.lt.s32.totalorder %s211, 11
        %s213 = scalar_select %p212, %s211, 11
        %s214 = smul.addr %s213, 8
        %s215 = scalar_lea.vmem %s0, %s214
        %p216 = pneg %p43
        %p217 = pneg %p40
        %p218 = pneg %p64
        %p219 = pneg %p61
        %p220 = pneg %p85
        %p221 = pneg %p82
        %p222 = pneg %p106
        %p223 = pneg %p103
        %p224 = pneg %p132
        %p225 = pneg %p129
        %s226 = sand.u32 %s119, 1
        %s227 = scalar_lea.sflag [#allocation4], %s226
        %s228 = sand.u32 %s119, 1
        %s229 = smul.addr %s228, 32
        %s230 = scalar_lea.vmem [#allocation5], %s229
        %p231 = pneg %p153
        %p232 = pneg %p150
        %s233 = smul.u32 4, %s22
        %p234 = scmp.lt.s32.totalorder %s233, 11
        %s235 = scalar_select %p234, %s233, 11
        %s236 = smul.addr %s235, 8
        %s237 = scalar_lea.vmem %s0, %s236
        %s238 = smul.u32 4, %s22
        %s239 = smul.u32 4, %s22
        %v241 = vld [vmem:[%s237] sm:$0xff]
        %v242 = vld [vmem:[%s237 + $0x8] sm:$0xff]
        %v243 = vld [vmem:[%s237 + $0x10] sm:$0xff]
        %v244 = vld [vmem:[%s237 + $0x18] sm:$0xff]
        %v245 = vld [vmem:[%s1] sm:$0xf]
        %v246 = vld [vmem:[%s1 + $0x4] sm:$0xf]
        %v247 = vld [vmem:[%s1 + $0x8] sm:$0xf]
        %v248 = vld [vmem:[%s1 + $0xc] sm:$0xf]
        %v249 = vld [vmem:[%s1 + $0x10] sm:$0xf]
        %v250 = vld [vmem:[%s1 + $0x14] sm:$0xf]
        %v251 = vld [vmem:[%s1 + $0x18] sm:$0xf]
        %v252 = vld [vmem:[%s1 + $0x1c] sm:$0xf]
        %v253 = vld [vmem:[%s3] sm:$0x1]
        %v254 = vpack.c.bf16 %v242, %v241
        %v255 = vpack.c.bf16 %v244, %v243
        %v256 = vlaneseq
        %v257 = vshrl.u32 %v256, 7
        %v258 = vsub.s32 0, %v257
        %v259 = vrot.slane %v253, %v258
        %v268 = vunpack.c.l.b16 %v245
        %v269 = vunpack.c.l.b16 %v246
        %v270 = vunpack.c.l.b16 %v247
        %v271 = vunpack.c.l.b16 %v248
        %v272 = vunpack.c.l.b16 %v249
        %v273 = vunpack.c.l.b16 %v250
        %v274 = vunpack.c.l.b16 %v251
        %v275 = vunpack.c.l.b16 %v252
        %v276 = vpack.c.b16 %v269, %v268
        %v277 = vpack.c.b16 %v271, %v270
        %v278 = vpack.c.b16 %v273, %v272
        %v279 = vpack.c.b16 %v275, %v274
        %vm284 = vcmask 523264
        %v286 = vsel %vm284, %v254, 0
        %v289 = vsel %vm284, %v255, 0
        %291 = vmatprep.subr.bf16.mxu0 0
        %292 = vmatpush1.bf16.msra.mxu0 0
        %293 = vmatprep.subr.bf16.mxu0 0
        %294 = vmatpush1.bf16.msra.mxu0 0
        %295 = vmatprep.subr.bf16.mxu0 0
        %296 = vmatpush1.bf16.msra.mxu0 0
        %297 = vmatprep.subr.bf16.mxu0 0
        %298 = vmatpush1.bf16.msra.mxu0 0
        %299 = vmatprep.subr.bf16.mxu0 0
        %300 = vmatpush1.bf16.msra.mxu0 %v279
        %301 = vmatprep.subr.bf16.mxu0 0
        %302 = vmatpush1.bf16.msra.mxu0 %v278
        %303 = vmatprep.subr.bf16.mxu0 0
        %304 = vmatpush1.bf16.msra.mxu0 %v277
        %305 = vmatprep.subr.bf16.mxu0 0
        %306 = vmatpush1.bf16.msra.mxu0 %v276
        %307 = vmatprep.subr.bf16.mxu0 0
        %308 = vmatpush2.bf16.msra.mxu0 0
        %309 = vmatprep.subr.bf16.mxu0 0
        %310 = vmatpush2.bf16.msra.mxu0 0
        %311 = vmatprep.subr.bf16.mxu0 0
        %312 = vmatpush2.bf16.msra.mxu0 0
        %313 = vmatprep.subr.bf16.mxu0 0
        %314 = vmatpush2.bf16.msra.mxu0 0
        %315 = vmatprep.subr.bf16.mxu0 0
        %316 = vmatpush2.bf16.msra.mxu0 0
        %317 = vmatprep.subr.bf16.mxu0 0
        %318 = vmatpush2.bf16.msra.mxu0 0
        %319 = vmatprep.subr.bf16.mxu0 0
        %320 = vmatpush2.bf16.msra.mxu0 0
        %321 = vmatprep.subr.bf16.mxu0 0
        %322 = vmatpush2.bf16.msra.mxu0 0
        %323 = vmatprep.mubr.bf16.mxu0 0
        %324 = vmatmul.mubr.bf16.gmra.mxu0 %v286
        %v325 = vpop.f32.mrf.mxu0
        %v326 = vadd.f32 %v259, %v325
        %v327 = vpop.f32.mrf.mxu0
        %v328 = vpop.f32.mrf.mxu0
        %v329 = vadd.f32 %v259, %v328
        %v330 = vpop.f32.mrf.mxu0
        %331 = vmatprep.mubr.bf16.mxu0 0
        %332 = vmatmul.mubr.bf16.gmra.mxu0 %v289
        %v333 = vpop.f32.mrf.mxu0
        %v334 = vadd.f32 %v259, %v333
        %v335 = vpop.f32.mrf.mxu0
        %v336 = vpop.f32.mrf.mxu0
        %v337 = vadd.f32 %v259, %v336
        %v338 = vpop.f32.mrf.mxu0
        %339 = vdwg.mxu0
        %v340 = vmax.f32 %v326, 0.0
        %v341 = vmax.f32 %v329, 0.0
        %v342 = vmax.f32 %v334, 0.0
        %v343 = vmax.f32 %v337, 0.0
        %v344 = vld [vmem:[#allocation2] sm:$0xf]
        %v345 = vld [vmem:[#allocation2 + $0x4] sm:$0xf]
        %v346 = vld [vmem:[#allocation2 + $0x8] sm:$0xf]
        %v347 = vld [vmem:[#allocation2 + $0xc] sm:$0xf]
        %v348 = vld [vmem:[#allocation2 + $0x10] sm:$0xf]
        %v349 = vld [vmem:[#allocation2 + $0x14] sm:$0xf]
        %v350 = vld [vmem:[#allocation2 + $0x18] sm:$0xf]
        %v351 = vld [vmem:[#allocation2 + $0x1c] sm:$0xf]
        %v352 = vld [vmem:[#allocation2 + $0x20] sm:$0xf]
        %v353 = vld [vmem:[#allocation2 + $0x24] sm:$0xf]
        %v354 = vld [vmem:[#allocation2 + $0x28] sm:$0xf]
        %v355 = vld [vmem:[#allocation2 + $0x2c] sm:$0xf]
        %v356 = vld [vmem:[#allocation2 + $0x30] sm:$0xf]
        %v357 = vld [vmem:[#allocation2 + $0x34] sm:$0xf]
        %v358 = vld [vmem:[#allocation2 + $0x38] sm:$0xf]
        %v359 = vld [vmem:[#allocation2 + $0x3c] sm:$0xf]
        %v360 = vld [vmem:[%s3 + $0x1] sm:$0x1]
        %v361 = vpack.c.bf16 %v341, %v340
        %v362 = vpack.c.bf16 %v343, %v342
        %v363 = vlaneseq
        %v364 = vshrl.u32 %v363, 7
        %v365 = vsub.s32 0, %v364
        %v366 = vrot.slane %v360, %v365
        %v383 = vunpack.c.l.b16 %v344
        %v384 = vunpack.c.l.b16 %v345
        %v385 = vunpack.c.l.b16 %v346
        %v386 = vunpack.c.l.b16 %v347
        %v387 = vunpack.c.l.b16 %v348
        %v388 = vunpack.c.l.b16 %v349
        %v389 = vunpack.c.l.b16 %v350
        %v390 = vunpack.c.l.b16 %v351
        %v391 = vunpack.c.l.b16 %v352
        %v392 = vunpack.c.l.b16 %v353
        %v393 = vunpack.c.l.b16 %v354
        %v394 = vunpack.c.l.b16 %v355
        %v395 = vunpack.c.l.b16 %v356
        %v396 = vunpack.c.l.b16 %v357
        %v397 = vunpack.c.l.b16 %v358
        %v398 = vunpack.c.l.b16 %v359
        %v399 = vpack.c.b16 %v384, %v383
        %v400 = vpack.c.b16 %v386, %v385
        %v401 = vpack.c.b16 %v388, %v387
        %v402 = vpack.c.b16 %v390, %v389
        %v403 = vpack.c.b16 %v392, %v391
        %v404 = vpack.c.b16 %v394, %v393
        %v405 = vpack.c.b16 %v396, %v395
        %v406 = vpack.c.b16 %v398, %v397
        %415 = vmatprep.subr.bf16.mxu0 0
        %416 = vmatpush1.bf16.msra.mxu0 %v406
        %417 = vmatprep.subr.bf16.mxu0 0
        %418 = vmatpush1.bf16.msra.mxu0 %v405
        %419 = vmatprep.subr.bf16.mxu0 0
        %420 = vmatpush1.bf16.msra.mxu0 %v404
        %421 = vmatprep.subr.bf16.mxu0 0
        %422 = vmatpush1.bf16.msra.mxu0 %v403
        %423 = vmatprep.subr.bf16.mxu0 0
        %424 = vmatpush1.bf16.msra.mxu0 %v402
        %425 = vmatprep.subr.bf16.mxu0 0
        %426 = vmatpush1.bf16.msra.mxu0 %v401
        %427 = vmatprep.subr.bf16.mxu0 0
        %428 = vmatpush1.bf16.msra.mxu0 %v400
        %429 = vmatprep.subr.bf16.mxu0 0
        %430 = vmatpush1.bf16.msra.mxu0 %v399
        %431 = vmatprep.subr.bf16.mxu0 0
        %432 = vmatpush2.bf16.msra.mxu0 0
        %433 = vmatprep.subr.bf16.mxu0 0
        %434 = vmatpush2.bf16.msra.mxu0 0
        %435 = vmatprep.subr.bf16.mxu0 0
        %436 = vmatpush2.bf16.msra.mxu0 0
        %437 = vmatprep.subr.bf16.mxu0 0
        %438 = vmatpush2.bf16.msra.mxu0 0
        %439 = vmatprep.subr.bf16.mxu0 0
        %440 = vmatpush2.bf16.msra.mxu0 0
        %441 = vmatprep.subr.bf16.mxu0 0
        %442 = vmatpush2.bf16.msra.mxu0 0
        %443 = vmatprep.subr.bf16.mxu0 0
        %444 = vmatpush2.bf16.msra.mxu0 0
        %445 = vmatprep.subr.bf16.mxu0 0
        %446 = vmatpush2.bf16.msra.mxu0 0
        %447 = vmatprep.mubr.bf16.mxu0 0
        %448 = vmatmul.mubr.bf16.gmra.mxu0 %v361
        %v449 = vpop.f32.mrf.mxu0
        %v450 = vadd.f32 %v366, %v449
        %v451 = vpop.f32.mrf.mxu0
        %v452 = vpop.f32.mrf.mxu0
        %v453 = vadd.f32 %v366, %v452
        %v454 = vpop.f32.mrf.mxu0
        %455 = vmatprep.mubr.bf16.mxu0 0
        %456 = vmatmul.mubr.bf16.gmra.mxu0 %v362
        %v457 = vpop.f32.mrf.mxu0
        %v458 = vadd.f32 %v366, %v457
        %v459 = vpop.f32.mrf.mxu0
        %v460 = vpop.f32.mrf.mxu0
        %v461 = vadd.f32 %v366, %v460
        %v462 = vpop.f32.mrf.mxu0
        %463 = vdwg.mxu0
        %v464 = vmax.f32 %v450, 0.0
        %v465 = vmax.f32 %v453, 0.0
        %v466 = vmax.f32 %v458, 0.0
        %v467 = vmax.f32 %v461, 0.0
        %v468 = vld [vmem:[#allocation2 + $0x40] sm:$0xf]
        %v469 = vld [vmem:[#allocation2 + $0x44] sm:$0xf]
        %v470 = vld [vmem:[#allocation2 + $0x48] sm:$0xf]
        %v471 = vld [vmem:[#allocation2 + $0x4c] sm:$0xf]
        %v472 = vld [vmem:[#allocation2 + $0x50] sm:$0xf]
        %v473 = vld [vmem:[#allocation2 + $0x54] sm:$0xf]
        %v474 = vld [vmem:[#allocation2 + $0x58] sm:$0xf]
        %v475 = vld [vmem:[#allocation2 + $0x5c] sm:$0xf]
        %v476 = vld [vmem:[#allocation2 + $0x60] sm:$0xf]
        %v477 = vld [vmem:[#allocation2 + $0x64] sm:$0xf]
        %v478 = vld [vmem:[#allocation2 + $0x68] sm:$0xf]
        %v479 = vld [vmem:[#allocation2 + $0x6c] sm:$0xf]
        %v480 = vld [vmem:[#allocation2 + $0x70] sm:$0xf]
        %v481 = vld [vmem:[#allocation2 + $0x74] sm:$0xf]
        %v482 = vld [vmem:[#allocation2 + $0x78] sm:$0xf]
        %v483 = vld [vmem:[#allocation2 + $0x7c] sm:$0xf]
        %v484 = vld [vmem:[%s3 + $0x2] sm:$0x1]
        %v485 = vpack.c.bf16 %v465, %v464
        %v486 = vpack.c.bf16 %v467, %v466
        %v487 = vlaneseq
        %v488 = vshrl.u32 %v487, 7
        %v489 = vsub.s32 0, %v488
        %v490 = vrot.slane %v484, %v489
        %v507 = vunpack.c.l.b16 %v468
        %v508 = vunpack.c.l.b16 %v469
        %v509 = vunpack.c.l.b16 %v470
        %v510 = vunpack.c.l.b16 %v471
        %v511 = vunpack.c.l.b16 %v472
        %v512 = vunpack.c.l.b16 %v473
        %v513 = vunpack.c.l.b16 %v474
        %v514 = vunpack.c.l.b16 %v475
        %v515 = vunpack.c.l.b16 %v476
        %v516 = vunpack.c.l.b16 %v477
        %v517 = vunpack.c.l.b16 %v478
        %v518 = vunpack.c.l.b16 %v479
        %v519 = vunpack.c.l.b16 %v480
        %v520 = vunpack.c.l.b16 %v481
        %v521 = vunpack.c.l.b16 %v482
        %v522 = vunpack.c.l.b16 %v483
        %v523 = vpack.c.b16 %v508, %v507
        %v524 = vpack.c.b16 %v510, %v509
        %v525 = vpack.c.b16 %v512, %v511
        %v526 = vpack.c.b16 %v514, %v513
        %v527 = vpack.c.b16 %v516, %v515
        %v528 = vpack.c.b16 %v518, %v517
        %v529 = vpack.c.b16 %v520, %v519
        %v530 = vpack.c.b16 %v522, %v521
        %539 = vmatprep.subr.bf16.mxu0 0
        %540 = vmatpush1.bf16.msra.mxu0 %v530
        %541 = vmatprep.subr.bf16.mxu0 0
        %542 = vmatpush1.bf16.msra.mxu0 %v529
        %543 = vmatprep.subr.bf16.mxu0 0
        %544 = vmatpush1.bf16.msra.mxu0 %v528
        %545 = vmatprep.subr.bf16.mxu0 0
        %546 = vmatpush1.bf16.msra.mxu0 %v527
        %547 = vmatprep.subr.bf16.mxu0 0
        %548 = vmatpush1.bf16.msra.mxu0 %v526
        %549 = vmatprep.subr.bf16.mxu0 0
        %550 = vmatpush1.bf16.msra.mxu0 %v525
        %551 = vmatprep.subr.bf16.mxu0 0
        %552 = vmatpush1.bf16.msra.mxu0 %v524
        %553 = vmatprep.subr.bf16.mxu0 0
        %554 = vmatpush1.bf16.msra.mxu0 %v523
        %555 = vmatprep.subr.bf16.mxu0 0
        %556 = vmatpush2.bf16.msra.mxu0 0
        %557 = vmatprep.subr.bf16.mxu0 0
        %558 = vmatpush2.bf16.msra.mxu0 0
        %559 = vmatprep.subr.bf16.mxu0 0
        %560 = vmatpush2.bf16.msra.mxu0 0
        %561 = vmatprep.subr.bf16.mxu0 0
        %562 = vmatpush2.bf16.msra.mxu0 0
        %563 = vmatprep.subr.bf16.mxu0 0
        %564 = vmatpush2.bf16.msra.mxu0 0
        %565 = vmatprep.subr.bf16.mxu0 0
        %566 = vmatpush2.bf16.msra.mxu0 0
        %567 = vmatprep.subr.bf16.mxu0 0
        %568 = vmatpush2.bf16.msra.mxu0 0
        %569 = vmatprep.subr.bf16.mxu0 0
        %570 = vmatpush2.bf16.msra.mxu0 0
        %571 = vmatprep.mubr.bf16.mxu0 0
        %572 = vmatmul.mubr.bf16.gmra.mxu0 %v485
        %v573 = vpop.f32.mrf.mxu0
        %v574 = vadd.f32 %v490, %v573
        %v575 = vpop.f32.mrf.mxu0
        %v576 = vpop.f32.mrf.mxu0
        %v577 = vadd.f32 %v490, %v576
        %v578 = vpop.f32.mrf.mxu0
        %579 = vmatprep.mubr.bf16.mxu0 0
        %580 = vmatmul.mubr.bf16.gmra.mxu0 %v486
        %v581 = vpop.f32.mrf.mxu0
        %v582 = vadd.f32 %v490, %v581
        %v583 = vpop.f32.mrf.mxu0
        %v584 = vpop.f32.mrf.mxu0
        %v585 = vadd.f32 %v490, %v584
        %v586 = vpop.f32.mrf.mxu0
        %587 = vdwg.mxu0
        %v588 = vmax.f32 %v574, 0.0
        %v589 = vmax.f32 %v577, 0.0
        %v590 = vmax.f32 %v582, 0.0
        %v591 = vmax.f32 %v585, 0.0
        %v592 = vld [vmem:[#allocation2 + $0x80] sm:$0xf]
        %v593 = vld [vmem:[#allocation2 + $0x84] sm:$0xf]
        %v594 = vld [vmem:[#allocation2 + $0x88] sm:$0xf]
        %v595 = vld [vmem:[#allocation2 + $0x8c] sm:$0xf]
        %v596 = vld [vmem:[#allocation2 + $0x90] sm:$0xf]
        %v597 = vld [vmem:[#allocation2 + $0x94] sm:$0xf]
        %v598 = vld [vmem:[#allocation2 + $0x98] sm:$0xf]
        %v599 = vld [vmem:[#allocation2 + $0x9c] sm:$0xf]
        %v600 = vld [vmem:[#allocation2 + $0xa0] sm:$0xf]
        %v601 = vld [vmem:[#allocation2 + $0xa4] sm:$0xf]
        %v602 = vld [vmem:[#allocation2 + $0xa8] sm:$0xf]
        %v603 = vld [vmem:[#allocation2 + $0xac] sm:$0xf]
        %v604 = vld [vmem:[#allocation2 + $0xb0] sm:$0xf]
        %v605 = vld [vmem:[#allocation2 + $0xb4] sm:$0xf]
        %v606 = vld [vmem:[#allocation2 + $0xb8] sm:$0xf]
        %v607 = vld [vmem:[#allocation2 + $0xbc] sm:$0xf]
        %v608 = vld [vmem:[%s3 + $0x3] sm:$0x1]
        %v609 = vpack.c.bf16 %v589, %v588
        %v610 = vpack.c.bf16 %v591, %v590
        %v611 = vlaneseq
        %v612 = vshrl.u32 %v611, 7
        %v613 = vsub.s32 0, %v612
        %v614 = vrot.slane %v608, %v613
        %v631 = vunpack.c.l.b16 %v592
        %v632 = vunpack.c.l.b16 %v593
        %v633 = vunpack.c.l.b16 %v594
        %v634 = vunpack.c.l.b16 %v595
        %v635 = vunpack.c.l.b16 %v596
        %v636 = vunpack.c.l.b16 %v597
        %v637 = vunpack.c.l.b16 %v598
        %v638 = vunpack.c.l.b16 %v599
        %v639 = vunpack.c.l.b16 %v600
        %v640 = vunpack.c.l.b16 %v601
        %v641 = vunpack.c.l.b16 %v602
        %v642 = vunpack.c.l.b16 %v603
        %v643 = vunpack.c.l.b16 %v604
        %v644 = vunpack.c.l.b16 %v605
        %v645 = vunpack.c.l.b16 %v606
        %v646 = vunpack.c.l.b16 %v607
        %v647 = vpack.c.b16 %v632, %v631
        %v648 = vpack.c.b16 %v634, %v633
        %v649 = vpack.c.b16 %v636, %v635
        %v650 = vpack.c.b16 %v638, %v637
        %v651 = vpack.c.b16 %v640, %v639
        %v652 = vpack.c.b16 %v642, %v641
        %v653 = vpack.c.b16 %v644, %v643
        %v654 = vpack.c.b16 %v646, %v645
        %663 = vmatprep.subr.bf16.mxu0 0
        %664 = vmatpush1.bf16.msra.mxu0 %v654
        %665 = vmatprep.subr.bf16.mxu0 0
        %666 = vmatpush1.bf16.msra.mxu0 %v653
        %667 = vmatprep.subr.bf16.mxu0 0
        %668 = vmatpush1.bf16.msra.mxu0 %v652
        %669 = vmatprep.subr.bf16.mxu0 0
        %670 = vmatpush1.bf16.msra.mxu0 %v651
        %671 = vmatprep.subr.bf16.mxu0 0
        %672 = vmatpush1.bf16.msra.mxu0 %v650
        %673 = vmatprep.subr.bf16.mxu0 0
        %674 = vmatpush1.bf16.msra.mxu0 %v649
        %675 = vmatprep.subr.bf16.mxu0 0
        %676 = vmatpush1.bf16.msra.mxu0 %v648
        %677 = vmatprep.subr.bf16.mxu0 0
        %678 = vmatpush1.bf16.msra.mxu0 %v647
        %679 = vmatprep.subr.bf16.mxu0 0
        %680 = vmatpush2.bf16.msra.mxu0 0
        %681 = vmatprep.subr.bf16.mxu0 0
        %682 = vmatpush2.bf16.msra.mxu0 0
        %683 = vmatprep.subr.bf16.mxu0 0
        %684 = vmatpush2.bf16.msra.mxu0 0
        %685 = vmatprep.subr.bf16.mxu0 0
        %686 = vmatpush2.bf16.msra.mxu0 0
        %687 = vmatprep.subr.bf16.mxu0 0
        %688 = vmatpush2.bf16.msra.mxu0 0
        %689 = vmatprep.subr.bf16.mxu0 0
        %690 = vmatpush2.bf16.msra.mxu0 0
        %691 = vmatprep.subr.bf16.mxu0 0
        %692 = vmatpush2.bf16.msra.mxu0 0
        %693 = vmatprep.subr.bf16.mxu0 0
        %694 = vmatpush2.bf16.msra.mxu0 0
        %695 = vmatprep.mubr.bf16.mxu0 0
        %696 = vmatmul.mubr.bf16.gmra.mxu0 %v609
        %v697 = vpop.f32.mrf.mxu0
        %v698 = vadd.f32 %v614, %v697
        %v699 = vpop.f32.mrf.mxu0
        %v700 = vpop.f32.mrf.mxu0
        %v701 = vadd.f32 %v614, %v700
        %v702 = vpop.f32.mrf.mxu0
        %703 = vmatprep.mubr.bf16.mxu0 0
        %704 = vmatmul.mubr.bf16.gmra.mxu0 %v610
        %v705 = vpop.f32.mrf.mxu0
        %v706 = vadd.f32 %v614, %v705
        %v707 = vpop.f32.mrf.mxu0
        %v708 = vpop.f32.mrf.mxu0
        %v709 = vadd.f32 %v614, %v708
        %v710 = vpop.f32.mrf.mxu0
        %711 = vdwg.mxu0
        %712 = vst [vmem:[%s230] sm:$0xff] %v698
        %713 = vst [vmem:[%s230 + $0x8] sm:$0xff] %v701
        %714 = vst [vmem:[%s230 + $0x10] sm:$0xff] %v706
        %715 = vst [vmem:[%s230 + $0x18] sm:$0xff] %v709
        %p716 = scmp.eq.s32.totalorder %s22, 0
        // Predicated region
        $region41: #{tpu_custom_call.1} parent=35 // pred_check
          %p717 = pneg %p716
        $region42: #{tpu_custom_call.1} parent=35 // pred_check_branch
          %719 = sbr.rel (%p717) target = $region44
        $region43: #{tpu_custom_call.1} parent=35 // pred_region
          %v720 = vlaneseq
          %v721 = vshrl.u32 %v720, 7
          %vm722 = vcmp.eq.s32.totalorder %v721, 0
          %v723 = vsel %vm722, -inf, 0.0
          %724 = vst [vmem:[#allocation6] sm:$0xff] %v723
        $region44: #{tpu_custom_call.1} parent=35 // pred_fallthru
          _
        %v725 = vlaneseq
        %v726 = vshrl.u32 %v725, 7
        %v727 = vadd.s32 %v726, 8
        %v728 = vadd.s32 %v726, 16
        %v729 = vadd.s32 %v726, 24
        %s730 = smul.u32 %s22, 32
        %v731 = vstv %s730
        %v732 = vadd.s32 %v726, %v731
        %v733 = vadd.s32 %v727, %v731
        %v734 = vadd.s32 %v728, %v731
        %v735 = vadd.s32 %v729, %v731
        %vm736 = vcmp.lt.s32.totalorder %v732, 80
        %vm737 = vcmp.lt.s32.totalorder %v733, 80
        %vm738 = vcmp.lt.s32.totalorder %v734, 80
        %vm739 = vcmp.lt.s32.totalorder %v735, 80
        %v740 = vsel %vm736, %v698, -inf
        %v741 = vsel %vm737, %v701, -inf
        %v742 = vsel %vm738, %v706, -inf
        %v743 = vsel %vm739, %v709, -inf
        %v744 = vld [vmem:[#allocation6] sm:$0x1]
        %v745 = vld [vmem:[#allocation6 + $0x1] sm:$0x1]
        %v746 = vmax.f32 %v740, %v741
        %v747 = vmax.f32 %v742, %v743
        %v748 = vmax.f32 %v746, %v747
        %v749 = vrot.slane %v748, 4
        %v750 = vmax.f32 %v748, %v749
        %v751 = vrot.slane %v750, 2
        %v752 = vmax.f32 %v750, %v751
        %v753 = vrot.slane %v752, 1
        %v754 = vmax.f32 %v752, %v753
        %v755 = vmax.f32 %v744, %v754
        %v756 = vsub.f32 %v744, %v755
        %v757 = vmul.f32 %v756, 1.442695
        %v758 = vpow.pop %v757
        %v759 = vmul.f32 %v745, %v758
        %v760 = vlaneseq
        %v761 = vshrl.u32 %v760, 7
        %v762 = vsub.s32 0, %v761
        %v763 = vrot.slane %v755, %v762
        %v764 = vsub.f32 %v740, %v763
        %v765 = vsub.f32 %v741, %v763
        %v766 = vsub.f32 %v742, %v763
        %v767 = vsub.f32 %v743, %v763
        %v768 = vmul.f32 %v764, 1.442695
        %v769 = vpow.pop %v768
        %v770 = vmul.f32 %v765, 1.442695
        %v771 = vpow.pop %v770
        %v772 = vmul.f32 %v766, 1.442695
        %v773 = vpow.pop %v772
        %v774 = vmul.f32 %v767, 1.442695
        %v775 = vpow.pop %v774
        %v776 = vadd.f32 %v769, %v771
        %v777 = vadd.f32 %v776, %v773
        %v778 = vadd.f32 %v777, %v775
        %v779 = vrot.slane %v778, 4
        %v780 = vadd.f32 %v778, %v779
        %v781 = vrot.slane %v780, 2
        %v782 = vadd.f32 %v780, %v781
        %v783 = vrot.slane %v782, 1
        %v784 = vadd.f32 %v782, %v783
        %v785 = vadd.f32 %v759, %v784
        %786 = vst [vmem:[#allocation6] sm:$0x1] %v755
        %787 = vst [vmem:[#allocation6 + $0x1] sm:$0x1] %v785
        %s788 = sand.u32 %s119, 1
        %s789 = scalar_lea.sflag [#allocation4], %s788
        %s790 = sand.u32 %s119, 1
        %s791 = smul.addr %s790, 32
        %s792 = scalar_lea.vmem [#allocation5], %s791
        // Predicated region
        $region45: #{tpu_custom_call.1} parent=35 // pred_check
          %p793 = pneg %p129
        $region46: #{tpu_custom_call.1} parent=35 // pred_check_branch
          %795 = sbr.rel (%p793) target = $region48
        $region47: #{tpu_custom_call.1} parent=35 // pred_region
          %s796 = smul.u32 4, %s22
          %s798 = ssub.s32 512, 512
          %799 = vsyncadd %s789, %s798
          %s800 = smul.addr %s796, 128
          %s801 = scalar_lea.hbm %s4, %s800
          %s802 = sshll.u32 %s792, 4
          %s803 = int_to_ptr.vmem [resolvable:$true] %s802
          %808 = dma.vmem_to_hbm [thread:$0]  %s803, 512, %s801, %s789, 128, 128, 8
        $region48: #{tpu_custom_call.1} parent=35 // pred_fallthru
          _
        // Predicated region
        $region49: #{tpu_custom_call.1} parent=35 // pred_check
          %p809 = pneg %p150
        $region50: #{tpu_custom_call.1} parent=35 // pred_check_branch
          %811 = sbr.rel (%p809) target = $region52
        $region51: #{tpu_custom_call.1} parent=35 // pred_region
          %s813 = ssub.s32 128, 128
          %814 = vsyncadd [#allocation7], %s813
          %s816 = sshll.u32 [#allocation6], 4
          %s817 = int_to_ptr.vmem [resolvable:$true] %s816
          %819 = dma.vmem_to_hbm [thread:$0]  %s817, 128, %s5, [#allocation7]
        $region52: #{tpu_custom_call.1} parent=35 // pred_fallthru
          _
        // Predicated region
        $region53: #{tpu_custom_call.1} parent=35 // pred_check
          %p820 = pneg %p150
        $region54: #{tpu_custom_call.1} parent=35 // pred_check_branch
          %822 = sbr.rel (%p820) target = $region56
        $region55: #{tpu_custom_call.1} parent=35 // pred_region
          %823 = dma.done [#allocation7], 128
        $region56: #{tpu_custom_call.1} parent=35 // pred_fallthru
          _
      $region36: #{tpu_custom_call.1} parent=5 // pred_fallthru
        _
      %p824 = scmp.le.s32.totalorder 2, %s17
      // Predicated region
      $region57: #{tpu_custom_call.1} parent=5 // pred_check
        %p825 = pneg %p824
      $region58: #{tpu_custom_call.1} parent=5 // pred_check_branch
        %827 = sbr.rel (%p825) target = $region60
      $region59: #{tpu_custom_call.1} parent=5 // pred_region
        %s828 = ssub.s32 %s17, 2
        // Predicated region
        $region61: #{tpu_custom_call.1} parent=59 // pred_check
          %p829 = pneg %p135
        $region62: #{tpu_custom_call.1} parent=59 // pred_check_branch
          %831 = sbr.rel (%p829) target = $region64
        $region63: #{tpu_custom_call.1} parent=59 // pred_region
          %s832 = sand.u32 %s120, 1
          %s833 = scalar_lea.sflag [#allocation4], %s832
          %s834 = sand.u32 %s120, 1
          %s835 = smul.addr %s834, 32
          %s836 = scalar_lea.vmem [#allocation5], %s835
          %837 = dma.done %s833, 512
        $region64: #{tpu_custom_call.1} parent=59 // pred_fallthru
          _
      $region60: #{tpu_custom_call.1} parent=5 // pred_fallthru
        _
    $region6: #{tpu_custom_call.1} parent=1 // loop_footer
      %s21 = sadd.s32 1, %s17
    $region7: #{tpu_custom_call.1} parent=1 // loop_footer_branch
      %16 = sbr.rel target = $region3
    $region8: #{tpu_custom_call.1} parent=1 // loop_exit
      _
    %838 = vsyncpa [#allocation3], 1
    %s839 = scalar_lea.sflag [#allocation3], 1
    %840 = vsyncpa %s839, 1
    %841 = vsyncpa [#allocation4], 1
    %s842 = scalar_lea.sflag [#allocation4], 1
    %843 = vsyncpa %s842, 1
    %844 = vsyncpa [#allocation7], 1

</llo_original>
